<compile_context>
chip_gen: v6e
topology: v6e:2x2x1
jax: 0.10.0
libtpu: 0.0.40
codegen_flags: <defaults>
</compile_context>

<pallas_src>
import functools

import jax
import jax.numpy as jnp
from jax.experimental import pallas as pl
from jax.experimental.pallas import tpu as pltpu

# CLIP image normalization constants (torchvision Normalize in the CLIP preprocessor)
_CLIP_MEAN = (0.48145466, 0.4578275, 0.40821073)
_CLIP_STD = (0.26862954, 0.26130258, 0.27577711)


# ---------------------------------------------------------------------------
# helpers
# ---------------------------------------------------------------------------
def _round_up(x, m):
    return ((x + m - 1) // m) * m


def _pick_tile(dim, pref, quantum):
    """Largest tile <= pref that divides dim (halving from pref), else the full dim."""
    if dim <= pref:
        return dim
    t = pref
    while t >= quantum:
        if dim % t == 0:
            return t
        t //= 2
    return dim


def _choose_row_tile(M, pref):
    """Pick (tm, M_pad) for the row axis.

    Prefers an exact multiple-of-8 divisor of M (no padding, searched over all
    multiples of 8, not just halvings); only pads M when the best divisor would
    collapse the tile below 128 rows (which would explode grid-step count and
    re-stream every weight tile from HBM)."""
    if M <= pref:
        return M, M                     # single full-extent row tile
    t = (pref // 8) * 8
    while t >= 8:
        if M % t == 0:
            break
        t -= 8
    if t >= 128:
        return t, M
    tm = min(pref, 256)
    return tm, _round_up(M, tm)


# ---------------------------------------------------------------------------
# Fused (LayerNorm +) Linear (+ QuickGELU) (+ residual) kernel
# ---------------------------------------------------------------------------
def _fused_linear_kernel(*refs, do_ln, activation, has_residual, use_acc):
    it = iter(refs)
    x_ref = next(it)
    w_ref = next(it)
    b_ref = next(it)
    g_ref = next(it) if do_ln else None
    bb_ref = next(it) if do_ln else None
    r_ref = next(it) if has_residual else None
    o_ref = next(it)
    xn_ref = next(it) if do_ln else None        # bf16 (tm, K) cached LN output
    acc_ref = next(it) if use_acc else None     # f32  (tm, tn) accumulator

    if do_ln:
        # LayerNorm over the full feature row (K is un-tiled in this mode).
        # Computed once per row-tile (j == 0) and reused for every N tile.
        @pl.when(pl.program_id(1) == 0)
        def _ln():
            xf = x_ref[...].astype(jnp.float32)
            mu = jnp.mean(xf, axis=-1, keepdims=True)
            xc = xf - mu
            var = jnp.mean(xc * xc, axis=-1, keepdims=True)
            xn = xc * jax.lax.rsqrt(var + 1e-5)
            xn_ref[...] = (xn * g_ref[...] + bb_ref[...]).astype(xn_ref.dtype)

        x = xn_ref[...]
    else:
        x = x_ref[...]

    def _epilogue(y):
        y = y + b_ref[...]
        if activation == "quickgelu":            # CLIP QuickGELU: y * sigmoid(1.702 y)
            y = y * jax.nn.sigmoid(1.702 * y)
        if has_residual:
            y = y + r_ref[...].astype(jnp.float32)
        o_ref[...] = y.astype(o_ref.dtype)

    if use_acc:
        @pl.when(pl.program_id(2) == 0)
        def _init():
            acc_ref[...] = jnp.zeros_like(acc_ref)

        acc_ref[...] += jnp.dot(x, w_ref[...], preferred_element_type=jnp.float32)

        @pl.when(pl.program_id(2) == pl.num_programs(2) - 1)
        def _fin():
            _epilogue(acc_ref[...])
    else:
        # K fits in one tile: no scratch accumulator, no extra VMEM passes.
        _epilogue(jnp.dot(x, w_ref[...], preferred_element_type=jnp.float32))


def fused_linear(x, w, b, *, gamma=None, beta=None, residual=None, activation=None,
                 out_dtype=jnp.bfloat16, tm_pref=512, tn_pref=256, tk_pref=1024):
    """out = [LN](x) @ w + b [quickgelu] [+ residual], tiled over (M, N[, K])."""
    M, K = x.shape
    N = w.shape[1]
    do_ln = gamma is not None
    has_res = residual is not None

    x = x.astype(jnp.bfloat16)
    w = w.astype(jnp.bfloat16)
    b2 = b.astype(jnp.float32).reshape(1, N)

    tm, M_pad = _choose_row_tile(M, tm_pref)
    if M_pad != M:
        x = jnp.pad(x, ((0, M_pad - M), (0, 0)))
        if has_res:
            residual = jnp.pad(residual, ((0, M_pad - M), (0, 0)))

    tn = _pick_tile(N, tn_pref, 128)
    tk = K if do_ln else _pick_tile(K, tk_pref, 128)     # LN needs the full row
    gm, gn, gk = M_pad // tm, N // tn, K // tk
    use_acc = gk > 1

    inputs = [x, w, b2]
    in_specs = [
        pl.BlockSpec((tm, tk), lambda i, j, k: (i, k)),
        pl.BlockSpec((tk, tn), lambda i, j, k: (k, j)),
        pl.BlockSpec((1, tn), lambda i, j, k: (0, j)),
    ]
    if do_ln:
        inputs += [gamma.astype(jnp.float32).reshape(1, K),
                   beta.astype(jnp.float32).reshape(1, K)]
        in_specs += [pl.BlockSpec((1, tk), lambda i, j, k: (0, k)),
                     pl.BlockSpec((1, tk), lambda i, j, k: (0, k))]
    if has_res:
        inputs.append(residual.astype(jnp.bfloat16))
        in_specs.append(pl.BlockSpec((tm, tn), lambda i, j, k: (i, j)))

    scratch = []
    if do_ln:
        scratch.append(pltpu.VMEM((tm, K), jnp.bfloat16))     # cached LN(x) row tile
    if use_acc:
        scratch.append(pltpu.VMEM((tm, tn), jnp.float32))

    if do_ln:
        # j must execute sequentially per row-tile so the cached LN tile is valid.
        dims = ("parallel", "arbitrary", "arbitrary")
    else:
        dims = ("parallel", "parallel", "arbitrary")

    kernel = functools.partial(_fused_linear_kernel, do_ln=do_ln,
                               activation=activation, has_residual=has_res,
                               use_acc=use_acc)
    out = pl.pallas_call(
        kernel,
        out_shape=jax.ShapeDtypeStruct((M_pad, N), out_dtype),
        grid_spec=pltpu.PrefetchScalarGridSpec(
            num_scalar_prefetch=0,
            grid=(gm, gn, gk),
            in_specs=in_specs,
            out_specs=pl.BlockSpec((tm, tn), lambda i, j, k: (i, j)),
            scratch_shapes=scratch,
        ),
        compiler_params=pltpu.CompilerParams(dimension_semantics=dims),
    )(*inputs)
    return out[:M] if M_pad != M else out


# ---------------------------------------------------------------------------
# Fused (x + positional_embedding) -> LayerNorm  (ln_pre)
# ---------------------------------------------------------------------------
def _add_pos_ln_kernel(x_ref, pos_ref, g_ref, b_ref, o_ref):
    x = x_ref[0].astype(jnp.float32) + pos_ref[...].astype(jnp.float32)      # (T, D)
    mu = jnp.mean(x, axis=-1, keepdims=True)
    xc = x - mu
    var = jnp.mean(xc * xc, axis=-1, keepdims=True)
    y = xc * jax.lax.rsqrt(var + 1e-5) * g_ref[...] + b_ref[...]
    o_ref[0] = y.astype(o_ref.dtype)


def add_pos_layernorm(x, pos, gamma, beta, *, out_dtype=jnp.bfloat16):
    BN, T, D = x.shape
    g2 = gamma.astype(jnp.float32).reshape(1, D)
    b2 = beta.astype(jnp.float32).reshape(1, D)
    return pl.pallas_call(
        _add_pos_ln_kernel,
        out_shape=jax.ShapeDtypeStruct((BN, T, D), out_dtype),
        grid=(BN,),
        in_specs=[pl.BlockSpec((1, T, D), lambda i: (i, 0, 0)),
                  pl.BlockSpec((T, D), lambda i: (0, 0)),
                  pl.BlockSpec((1, D), lambda i: (0, 0)),
                  pl.BlockSpec((1, D), lambda i: (0, 0))],
        out_specs=pl.BlockSpec((1, T, D), lambda i: (i, 0, 0)),
        compiler_params=pltpu.CompilerParams(dimension_semantics=("parallel",)),
    )(x.astype(jnp.bfloat16), pos.astype(jnp.float32), g2, b2)


# ---------------------------------------------------------------------------
# Multi-head attention: 128-lane head groups on the grid, streaming head stores
# ---------------------------------------------------------------------------
def _attn_group_kernel(q_ref, k_ref, v_ref, o_ref, *, heads_per_group, head_dim, t_real):
    # q/k/v/o refs: (1, T, group_width) bf16; softmax scale already folded into q.
    T = q_ref.shape[1]
    for hi in range(heads_per_group):
        lo = hi * head_dim
        q = q_ref[0, :, pl.ds(lo, head_dim)]                        # (T, hd)
        k = k_ref[0, :, pl.ds(lo, head_dim)]
        v = v_ref[0, :, pl.ds(lo, head_dim)]
        # contract on the feature axis (no explicit transpose)
        s = jax.lax.dot_general(q, k, (((1,), (1,)), ((), ())),
                                preferred_element_type=jnp.float32)
        if t_real < T:
            key_ids = jax.lax.broadcasted_iota(jnp.int32, s.shape, 1)
            s = jnp.where(key_ids < t_real, s, -1e30)               # mask pad keys
        m = jnp.max(s, axis=-1, keepdims=True)
        p = jnp.exp(s - m)                                          # f32 exp (portable)
        p = p * pl.reciprocal(jnp.sum(p, axis=-1, keepdims=True), approx=True)
        o = jnp.dot(p.astype(v.dtype), v, preferred_element_type=jnp.float32)
        # streaming per-head store: bounds vreg live range, no concat/relayout
        o_ref[0, :, pl.ds(lo, head_dim)] = o.astype(o_ref.dtype)


def attention(qkv, *, heads, t_real):
    BN, T, threeD = qkv.shape
    D = threeD // 3
    hd = D // heads
    qkv = qkv.astype(jnp.bfloat16)

    aligned = (D % 128 == 0) and (hd <= 128) and (128 % hd == 0)
    if aligned:
        # 128-lane head groups: aligned q/k/v loads, aligned output blocks, and
        # the group axis gives megacore parallelism even at tiny BN (v7x).
        gw = 128
        n_groups = D // gw
        dblk = D // gw
        in_arrays = (qkv, qkv, qkv)
        in_specs = [
            pl.BlockSpec((1, T, gw), lambda i, g: (i, 0, g)),
            pl.BlockSpec((1, T, gw), lambda i, g, d=dblk: (i, 0, d + g)),
            pl.BlockSpec((1, T, gw), lambda i, g, d=dblk: (i, 0, 2 * d + g)),
        ]
    else:
        # Fallback (D not a multiple of 128): one whole-slab group per image.
        gw = D
        n_groups = 1
        in_arrays = (qkv[:, :, :D], qkv[:, :, D:2 * D], qkv[:, :, 2 * D:])
        in_specs = [pl.BlockSpec((1, T, D), lambda i, g: (i, 0, 0))] * 3

    kernel = functools.partial(_attn_group_kernel, heads_per_group=gw // hd,
                               head_dim=hd, t_real=t_real)
    return pl.pallas_call(
        kernel,
        out_shape=jax.ShapeDtypeStruct((BN, T, D), jnp.bfloat16),
        grid=(BN, n_groups),
        in_specs=in_specs,
        out_specs=pl.BlockSpec((1, T, gw), lambda i, g: (i, 0, g)),
        compiler_params=pltpu.CompilerParams(
            dimension_semantics=("parallel", "parallel")),
    )(*in_arrays)


# ---------------------------------------------------------------------------
# Synthetic CLIP ViT parameters (deterministic init — no checkpoint load)
# ---------------------------------------------------------------------------
def init_clip_params(key, *, C, P, D, heads, layers, mlp_dim, T, E):
    def normal(k, shape, scale=0.02):
        return scale * jax.random.normal(k, shape, dtype=jnp.float32)

    keys = iter(jax.random.split(key, 8 + 8 * layers))
    params = {
        "conv1_w": normal(next(keys), (D, C, P, P)),          # conv bias=False in CLIP
        "class_embedding": normal(next(keys), (D,)),
        "positional_embedding": normal(next(keys), (T, D)),
        "ln_pre_g": jnp.ones((D,), jnp.float32),
        "ln_pre_b": jnp.zeros((D,), jnp.float32),
        "ln_post_g": jnp.ones((D,), jnp.float32),
        "ln_post_b": jnp.zeros((D,), jnp.float32),
        "proj": normal(next(keys), (D, E)),
        "layers": [],
    }
    for _ in range(layers):
        lp = {
            "ln1_g": jnp.ones((D,), jnp.float32),
            "ln1_b": jnp.zeros((D,), jnp.float32),
            "w_qkv": normal(next(keys), (D, 3 * D)),
            "b_qkv": jnp.zeros((3 * D,), jnp.float32),
            "w_out": normal(next(keys), (D, D)),
            "b_out": jnp.zeros((D,), jnp.float32),
            "ln2_g": jnp.ones((D,), jnp.float32),
            "ln2_b": jnp.zeros((D,), jnp.float32),
            "w_fc": normal(next(keys), (D, mlp_dim)),
            "b_fc": jnp.zeros((mlp_dim,), jnp.float32),
            "w_proj": normal(next(keys), (mlp_dim, D)),
            "b_proj": jnp.zeros((D,), jnp.float32),
        }
        params["layers"].append(lp)
    return params


# ---------------------------------------------------------------------------
# Forward pass (glue in JAX, compute in Pallas)
# ---------------------------------------------------------------------------
def clip_img_encoder_forward(obs_dict, params, camera_names, *, patch, heads):
    # x = stack over cameras, then '(b n) c h w'
    x = jnp.stack([obs_dict[f"{cam}_image"] for cam in camera_names], axis=1)
    B, Ncam, C, H, W = x.shape
    BN = B * Ncam
    # bf16 image: the 6-D patch shuffle below is the only full-image HBM pass
    # outside the kernels — doing it in bf16 halves that traffic (helps v5e most).
    x = x.reshape(BN, C, H, W).astype(jnp.bfloat16)

    P = patch
    gh, gw = H // P, W // P
    num_patches = gh * gw
    D = params["conv1_w"].shape[0]
    T = num_patches + 1
    T_pad = _round_up(T, 8)
    E = params["proj"].shape[1]
    hd = D // heads
    attn_scale = 1.0 / (hd ** 0.5)

    # --- patch extraction (NCHW conv1, stride=P, kernel=P -> matmul) --------
    # TODO(synk): reading NCHW directly via a (patch_row, patch_col) index_map
    # would remove this XLA shuffle, but per-patch blocks violate the (8,128)
    # BlockSpec quantum for P < 128.
    xp = x.reshape(BN, C, gh, P, gw, P)
    xp = xp.transpose(0, 2, 4, 1, 3, 5).reshape(BN * num_patches, C * P * P)
    w_pe = params["conv1_w"].transpose(1, 2, 3, 0).reshape(C * P * P, D)

    # fold CLIP Normalize(mean,std) into patch-embed weights: (x-m)*s @ W = x @ (s*W) - (m*s)@W
    mean_k = jnp.repeat(jnp.asarray(_CLIP_MEAN, jnp.float32), P * P)         # (C*P*P,)
    istd_k = jnp.repeat(1.0 / jnp.asarray(_CLIP_STD, jnp.float32), P * P)
    w_pe_n = w_pe * istd_k[:, None]
    b_pe = -(mean_k * istd_k) @ w_pe                                         # (D,)

    tok = fused_linear(xp, w_pe_n, b_pe, out_dtype=jnp.bfloat16)             # (BN*np, D)
    tok = tok.reshape(BN, num_patches, D)                                    # stays bf16

    cls = jnp.broadcast_to(params["class_embedding"].astype(jnp.bfloat16).reshape(1, 1, D),
                           (BN, 1, D))
    h3 = jnp.concatenate([cls, tok], axis=1)                                 # (BN, T, D) bf16
    h3 = jnp.pad(h3, ((0, 0), (0, T_pad - T), (0, 0)))                       # pad tokens once
    pos = jnp.pad(params["positional_embedding"], ((0, T_pad - T), (0, 0)))

    # fused (x + pos) -> ln_pre; pad keys are masked later in attention
    h = add_pos_layernorm(h3, pos, params["ln_pre_g"], params["ln_pre_b"])   # (BN, T_pad, D)
    M = BN * T_pad
    h = h.reshape(M, D)                                                      # bf16 residual stream

    # softmax scale folded into the q columns of the QKV projection (free)
    q_scale = jnp.concatenate([jnp.full((D,), attn_scale, jnp.float32),
                               jnp.ones((2 * D,), jnp.float32)])

    # --- transformer residual blocks ----------------------------------------
    for lp in params["layers"]:
        w_qkv = lp["w_qkv"] * q_scale[None, :]
        b_qkv = lp["b_qkv"] * q_scale
        # fused LN1 + QKV projection (LN computed once per row-tile)
        qkv = fused_linear(h, w_qkv, b_qkv,
                           gamma=lp["ln1_g"], beta=lp["ln1_b"])              # (M, 3D)
        qkv = qkv.reshape(BN, T_pad, 3 * D)
        attn = attention(qkv, heads=heads, t_real=T).reshape(M, D)           # (M, D)
        # attn output projection with fused residual add
        h = fused_linear(attn, lp["w_out"], lp["b_out"], residual=h)
        # fused LN2 + MLP up-projection with QuickGELU
        y = fused_linear(h, lp["w_fc"], lp["b_fc"],
                         gamma=lp["ln2_g"], beta=lp["ln2_b"],
                         activation="quickgelu")
        # MLP down-projection with fused residual add
        h = fused_linear(y, lp["w_proj"], lp["b_proj"], residual=h)

    # --- pooled CLS token, fused final LN + projection (no bias) ------------
    h = h.reshape(BN, T_pad, D)
    cls_tok = h[:, 0, :]                                                     # (BN, D)
    emb = fused_linear(cls_tok, params["proj"], jnp.zeros((E,), jnp.float32),
                       gamma=params["ln_post_g"], beta=params["ln_post_b"],
                       out_dtype=jnp.float32)                                # (BN, E)

    # '(b n) d -> b n d', float()
    return emb.reshape(B, Ncam, E).astype(jnp.float32)


# ---------------------------------------------------------------------------
# Pure-JAX f32 reference (mirrors CLIP encode_image math) for validation
# ---------------------------------------------------------------------------
def reference_forward(obs_dict, params, camera_names, *, patch, heads):
    x = jnp.stack([obs_dict[f"{cam}_image"] for cam in camera_names], axis=1)
    B, Ncam, C, H, W = x.shape
    BN = B * Ncam
    x = x.reshape(BN, C, H, W).astype(jnp.float32)
    mean = jnp.asarray(_CLIP_MEAN, jnp.float32).reshape(1, 3, 1, 1)
    std = jnp.asarray(_CLIP_STD, jnp.float32).reshape(1, 3, 1, 1)
    x = (x - mean) / std

    P = patch
    gh, gw = H // P, W // P
    D = params["conv1_w"].shape[0]
    xp = x.reshape(BN, C, gh, P, gw, P).transpose(0, 2, 4, 1, 3, 5)
    xp = xp.reshape(BN * gh * gw, C * P * P)
    w_pe = params["conv1_w"].transpose(1, 2, 3, 0).reshape(C * P * P, D)
    tok = (xp @ w_pe).reshape(BN, gh * gw, D)

    cls = jnp.broadcast_to(params["class_embedding"].reshape(1, 1, D), (BN, 1, D))
    h = jnp.concatenate([cls, tok], axis=1) + params["positional_embedding"][None]

    def ln(z, g, b):
        mu = z.mean(-1, keepdims=True)
        var = ((z - mu) ** 2).mean(-1, keepdims=True)
        return (z - mu) * jax.lax.rsqrt(var + 1e-5) * g + b

    h = ln(h, params["ln_pre_g"], params["ln_pre_b"])
    T = h.shape[1]
    hd = D // heads
    for lp in params["layers"]:
        y = ln(h, lp["ln1_g"], lp["ln1_b"])
        qkv = y @ lp["w_qkv"] + lp["b_qkv"]
        q, k, v = qkv[..., :D], qkv[..., D:2 * D], qkv[..., 2 * D:]
        q = q.reshape(BN, T, heads, hd).transpose(0, 2, 1, 3)
        k = k.reshape(BN, T, heads, hd).transpose(0, 2, 1, 3)
        v = v.reshape(BN, T, heads, hd).transpose(0, 2, 1, 3)
        s = jnp.einsum("bhqd,bhkd->bhqk", q, k) / (hd ** 0.5)
        p = jax.nn.softmax(s, axis=-1)
        o = jnp.einsum("bhqk,bhkd->bhqd", p, v).transpose(0, 2, 1, 3).reshape(BN, T, D)
        h = h + (o @ lp["w_out"] + lp["b_out"])
        y = ln(h, lp["ln2_g"], lp["ln2_b"])
        y = y @ lp["w_fc"] + lp["b_fc"]
        y = y * jax.nn.sigmoid(1.702 * y)
        h = h + (y @ lp["w_proj"] + lp["b_proj"])

    cls_t = ln(h[:, 0, :], params["ln_post_g"], params["ln_post_b"])
    emb = cls_t @ params["proj"]
    return emb.reshape(B, Ncam, -1).astype(jnp.float32)


# ---------------------------------------------------------------------------
if __name__ == "__main__":
    # Small synthetic CLIP-ViT config (D=128, hd=64 exercises the 128-lane
    # head-group attention path used by real CLIP ViTs).
    B, C, H, W = 2, 3, 32, 32
    PATCH, D, HEADS, LAYERS, MLP, E = 8, 128, 2, 2, 512, 64
    T = (H // PATCH) * (W // PATCH) + 1
    camera_names = ["front", "wrist"]

    key = jax.random.PRNGKey(0)
    k_params, k_front, k_wrist = jax.random.split(key, 3)
    params = init_clip_params(
        k_params, C=C, P=PATCH, D=D, heads=HEADS, layers=LAYERS, mlp_dim=MLP, T=T, E=E
    )

    obs_dict = {
        "front_image": jax.random.uniform(k_front, (B, C, H, W), jnp.float32),
        "wrist_image": jax.random.uniform(k_wrist, (B, C, H, W), jnp.float32),
    }

    emb = clip_img_encoder_forward(
        obs_dict, params, camera_names, patch=PATCH, heads=HEADS
    )
    emb = jax.block_until_ready(emb)

    assert emb.shape == (B, len(camera_names), E), emb.shape
    assert emb.dtype == jnp.float32
    assert bool(jnp.all(jnp.isfinite(emb)))

    # loose sanity check vs f32 reference (bf16 stream + approx softmax recip)
    ref = jax.block_until_ready(
        reference_forward(obs_dict, params, camera_names, patch=PATCH, heads=HEADS))
    max_err = float(jnp.max(jnp.abs(emb - ref)))
    assert max_err < 0.1, max_err

    print("KERNEL_OK")
</pallas_src>

<mosaic_0001>
module attributes {stable_mosaic.version = 11 : i64} {
  func.func @_fused_linear_kernel(%arg0: i32, %arg1: i32, %arg2: i32, %arg3: memref<64x192xbf16, #tpu.memory_space<vmem>>, %arg4: memref<192x128xbf16, #tpu.memory_space<vmem>>, %arg5: memref<1x128xf32, #tpu.memory_space<vmem>>, %arg6: memref<64x128xbf16, #tpu.memory_space<vmem>>) attributes {dimension_semantics = [#tpu.dimension_semantics<parallel>, #tpu.dimension_semantics<parallel>, #tpu.dimension_semantics<arbitrary>], iteration_bounds = array<i64: 1, 1, 1>, scalar_prefetch = 0 : i64, scratch_operands = 0 : i64, tpu.core_type = #tpu.core_type<tc>, window_params = [{transform_indices = @transform_0, window_bounds = array<i64: 64, 192>}, {transform_indices = @transform_1, window_bounds = array<i64: 192, 128>}, {transform_indices = @transform_2, window_bounds = array<i64: 1, 128>}, {transform_indices = @transform_3, window_bounds = array<i64: 64, 128>}]} {
    %c0 = arith.constant 0 : index
    %c0_0 = arith.constant 0 : index
    %0 = vector.load %arg3[%c0, %c0_0] : memref<64x192xbf16, #tpu.memory_space<vmem>>, vector<64x192xbf16>
    %c0_1 = arith.constant 0 : index
    %c0_2 = arith.constant 0 : index
    %1 = vector.load %arg4[%c0_1, %c0_2] : memref<192x128xbf16, #tpu.memory_space<vmem>>, vector<192x128xbf16>
    %cst = arith.constant dense<0.000000e+00> : vector<64x128xf32>
    %2 = tpu.matmul %0, %1, %cst {dimension_numbers = #tpu.dot_dimension_numbers<[1], [0], [0], [1], [0, 0, 1, 1], [], []>} : vector<64x192xbf16>, vector<192x128xbf16>, vector<64x128xf32> -> vector<64x128xf32>
    %c0_3 = arith.constant 0 : index
    %c0_4 = arith.constant 0 : index
    %3 = vector.load %arg5[%c0_3, %c0_4] : memref<1x128xf32, #tpu.memory_space<vmem>>, vector<1x128xf32>
    %4 = vector.broadcast %3 : vector<1x128xf32> to vector<64x128xf32>
    %5 = arith.addf %2, %4 : vector<64x128xf32>
    %6 = arith.truncf %5 : vector<64x128xf32> to vector<64x128xbf16>
    %c0_5 = arith.constant 0 : index
    %c0_6 = arith.constant 0 : index
    %7 = vector.load %arg6[%c0_5, %c0_6] : memref<64x128xbf16, #tpu.memory_space<vmem>>, vector<64x128xbf16>
    tpu.vector_store %arg6[%c0_5, %c0_6], %6 {strides = array<i32>} : memref<64x128xbf16, #tpu.memory_space<vmem>>, vector<64x128xbf16>,
    return
  }
  func.func @transform_0(%arg0: i32, %arg1: i32, %arg2: i32) -> (i32, i32) {
    %c0_i32 = arith.constant 0 : i32
    return %arg0, %arg2 : i32, i32
  }
  func.func @transform_1(%arg0: i32, %arg1: i32, %arg2: i32) -> (i32, i32) {
    %c0_i32 = arith.constant 0 : i32
    return %arg2, %arg1 : i32, i32
  }
  func.func @transform_2(%arg0: i32, %arg1: i32, %arg2: i32) -> (i32, i32) {
    %c0_i32 = arith.constant 0 : i32
    %c0_i32_0 = arith.constant 0 : i32
    return %c0_i32, %arg1 : i32, i32
  }
  func.func @transform_3(%arg0: i32, %arg1: i32, %arg2: i32) -> (i32, i32) {
    %c0_i32 = arith.constant 0 : i32
    return %arg0, %arg1 : i32, i32
  }
}

</mosaic_0001>

<llo_original>
// kernel: tpu_custom_call.1
$region0: #{tpu_custom_call.1}
  #allocation0 [shape = 'u32[]', space=smem, size = 0x4, offset = 0x4, fixed_abs, tag = 'smem constant byte address 0x4 - core index']
  #allocation1 [shape = 'u32[144,128]{1,0:T(1,128)}', space=vmem, size = 0x12000, scoped, tag = 'internal scratch']
  %s0 = inlined_call_operand.hbm [shape: bf16[64,192], index: 0, kind: input, shape index: {}]
  %s1 = inlined_call_operand.hbm [shape: bf16[192,128], index: 1, kind: input, shape index: {}]
  %s2 = inlined_call_operand.vmem [shape: f32[1,128], index: 2, kind: input, shape index: {}]
  %s3 = inlined_call_operand.hbm [shape: bf16[64,128], index: 3, kind: output, shape index: {}]
  %s4 = sld [smem:[#allocation0]]
  $region30: #{tpu_custom_call.1} parent=0
    _
  %s6 = ssub.s32 1, %s4
  %s7 = scalar_select 0, %s6, %s4
  $region1: #{tpu_custom_call.1} parent=0
    #allocation2 [shape = 'u8[32768]{0}', space=vmem, size = 0x8000, scoped, tag = 'input window, operand 0, single buffered']
    #allocation3 [shape = 's32[1]{0}', space=sflag, size = 0x4, scoped, tag = 'scoped memory for tpu_custom_call.1']
    #allocation4 [shape = 's32[1]{0}', space=sflag, size = 0x4, scoped, tag = 'scoped memory for tpu_custom_call.1']
    #allocation5 [shape = 'u8[49152]{0}', space=vmem, size = 0xc000, scoped, tag = 'input window, operand 1, single buffered']
    #allocation6 [shape = 's32[1]{0}', space=sflag, size = 0x4, scoped, tag = 'scoped memory for tpu_custom_call.1']
    #allocation7 [shape = 'u8[16384]{0}', space=vmem, size = 0x4000, scoped, tag = 'output window, operand 0, single buffered']
    %8 = vsyncpa [#allocation3], 0
    %9 = vsyncpa [#allocation6], 0
    %10 = vsyncpa [#allocation4], 0
    // Predicated region
    $region2: #{tpu_custom_call.1} parent=1 // pred_check
      _
    $region3: #{tpu_custom_call.1} parent=1 // pred_check_branch
      %12 = sbr.rel (0) target = $region5
    $region4: #{tpu_custom_call.1} parent=1 // pred_region
      %s14 = ssub.s32 1024, 1024
      %15 = vsyncadd [#allocation3], %s14
      %s16 = sshll.u32 [#allocation2], 4
      %s17 = int_to_ptr.vmem [resolvable:$true] %s16
      %22 = dma.hbm_to_vmem [thread:$0]  %s0, 1024, %s17, [#allocation3], 128, 128, 8
    $region5: #{tpu_custom_call.1} parent=1 // pred_fallthru
      _
    // Predicated region
    $region6: #{tpu_custom_call.1} parent=1 // pred_check
      _
    $region7: #{tpu_custom_call.1} parent=1 // pred_check_branch
      %24 = sbr.rel (0) target = $region9
    $region8: #{tpu_custom_call.1} parent=1 // pred_region
      %s26 = ssub.s32 1536, 1536
      %27 = vsyncadd [#allocation6], %s26
      %s28 = sshll.u32 [#allocation5], 4
      %s29 = int_to_ptr.vmem [resolvable:$true] %s28
      %34 = dma.hbm_to_vmem [thread:$0]  %s1, 1536, %s29, [#allocation6], 64, 64, 4
    $region9: #{tpu_custom_call.1} parent=1 // pred_fallthru
      _
    // Predicated region
    $region10: #{tpu_custom_call.1} parent=1 // pred_check
      _
    $region11: #{tpu_custom_call.1} parent=1 // pred_check_branch
      %36 = sbr.rel (0) target = $region13
    $region12: #{tpu_custom_call.1} parent=1 // pred_region
      _
    $region13: #{tpu_custom_call.1} parent=1 // pred_fallthru
      _
    // Predicated region
    $region14: #{tpu_custom_call.1} parent=1 // pred_check
      _
    $region15: #{tpu_custom_call.1} parent=1 // pred_check_branch
      %38 = sbr.rel (0) target = $region17
    $region16: #{tpu_custom_call.1} parent=1 // pred_region
      %39 = dma.done [#allocation3], 1024
    $region17: #{tpu_custom_call.1} parent=1 // pred_fallthru
      _
    // Predicated region
    $region18: #{tpu_custom_call.1} parent=1 // pred_check
      _
    $region19: #{tpu_custom_call.1} parent=1 // pred_check_branch
      %41 = sbr.rel (0) target = $region21
    $region20: #{tpu_custom_call.1} parent=1 // pred_region
      %42 = dma.done [#allocation6], 1536
    $region21: #{tpu_custom_call.1} parent=1 // pred_fallthru
      _
    %v44 = vld [vmem:[#allocation2] sm:$0xff]
    %v45 = vld [vmem:[#allocation2 + $0x8] sm:$0xff]
    %v46 = vld [vmem:[#allocation2 + $0x10] sm:$0xff]
    %v47 = vld [vmem:[#allocation2 + $0x18] sm:$0xff]
    %v48 = vld [vmem:[#allocation2 + $0x20] sm:$0xff]
    %v49 = vld [vmem:[#allocation2 + $0x28] sm:$0xff]
    %v50 = vld [vmem:[#allocation2 + $0x30] sm:$0xff]
    %v51 = vld [vmem:[#allocation2 + $0x38] sm:$0xff]
    %v52 = vld [vmem:[#allocation5] sm:$0xf]
    %v53 = vld [vmem:[#allocation5 + $0x4] sm:$0xf]
    %v54 = vld [vmem:[#allocation5 + $0x8] sm:$0xf]
    %v55 = vld [vmem:[#allocation5 + $0xc] sm:$0xf]
    %v56 = vld [vmem:[#allocation5 + $0x10] sm:$0xf]
    %v57 = vld [vmem:[#allocation5 + $0x14] sm:$0xf]
    %v58 = vld [vmem:[#allocation5 + $0x18] sm:$0xf]
    %v59 = vld [vmem:[#allocation5 + $0x1c] sm:$0xf]
    %v60 = vld [vmem:[#allocation5 + $0x20] sm:$0xf]
    %v61 = vld [vmem:[#allocation5 + $0x24] sm:$0xf]
    %v62 = vld [vmem:[#allocation5 + $0x28] sm:$0xf]
    %v63 = vld [vmem:[#allocation5 + $0x2c] sm:$0xf]
    %v64 = vld [vmem:[#allocation5 + $0x30] sm:$0xf]
    %v65 = vld [vmem:[#allocation5 + $0x34] sm:$0xf]
    %v66 = vld [vmem:[#allocation5 + $0x38] sm:$0xf]
    %v67 = vld [vmem:[#allocation5 + $0x3c] sm:$0xf]
    %v68 = vld [vmem:[#allocation5 + $0x40] sm:$0xf]
    %v69 = vld [vmem:[#allocation5 + $0x44] sm:$0xf]
    %v70 = vld [vmem:[#allocation5 + $0x48] sm:$0xf]
    %v71 = vld [vmem:[#allocation5 + $0x4c] sm:$0xf]
    %v72 = vld [vmem:[#allocation5 + $0x50] sm:$0xf]
    %v73 = vld [vmem:[#allocation5 + $0x54] sm:$0xf]
    %v74 = vld [vmem:[#allocation5 + $0x58] sm:$0xf]
    %v75 = vld [vmem:[#allocation5 + $0x5c] sm:$0xf]
    %v76 = vld [vmem:[%s2] sm:$0x1]
    %v78 = vlaneseq
    %v79 = vshrl.u32 %v78, 7
    %v80 = vsub.s32 0, %v79
    %v81 = vrot.slane %v76, %v80
    %v91 = vunpack.c.l.b16 %v44
    %v92 = vunpack.c.h.b16 %v44
    %v93 = vunpack.c.l.b16 %v45
    %v94 = vunpack.c.h.b16 %v45
    %v95 = vunpack.c.l.b16 %v46
    %v96 = vunpack.c.h.b16 %v46
    %v97 = vunpack.c.l.b16 %v47
    %v98 = vunpack.c.h.b16 %v47
    %v99 = vunpack.c.l.b16 %v48
    %v100 = vunpack.c.h.b16 %v48
    %v101 = vunpack.c.l.b16 %v49
    %v102 = vunpack.c.h.b16 %v49
    %v103 = vunpack.c.l.b16 %v50
    %v104 = vunpack.c.h.b16 %v50
    %v105 = vunpack.c.l.b16 %v51
    %v106 = vunpack.c.h.b16 %v51
    %v107 = vpack.c.b16 %v93, %v91
    %v108 = vpack.c.b16 %v94, %v92
    %v109 = vpack.c.b16 %v97, %v95
    %v110 = vpack.c.b16 %v98, %v96
    %v111 = vpack.c.b16 %v101, %v99
    %v112 = vpack.c.b16 %v102, %v100
    %v113 = vpack.c.b16 %v105, %v103
    %v114 = vpack.c.b16 %v106, %v104
    %v143 = vunpack.c.l.b16 %v52
    %v144 = vunpack.c.l.b16 %v53
    %v145 = vunpack.c.l.b16 %v54
    %v146 = vunpack.c.l.b16 %v55
    %v147 = vunpack.c.l.b16 %v56
    %v148 = vunpack.c.l.b16 %v57
    %v149 = vunpack.c.l.b16 %v58
    %v150 = vunpack.c.l.b16 %v59
    %v151 = vunpack.c.l.b16 %v60
    %v152 = vunpack.c.l.b16 %v61
    %v153 = vunpack.c.l.b16 %v62
    %v154 = vunpack.c.l.b16 %v63
    %v155 = vunpack.c.l.b16 %v64
    %v156 = vunpack.c.l.b16 %v65
    %v157 = vunpack.c.l.b16 %v66
    %v158 = vunpack.c.l.b16 %v67
    %v159 = vunpack.c.l.b16 %v68
    %v160 = vunpack.c.l.b16 %v69
    %v161 = vunpack.c.l.b16 %v70
    %v162 = vunpack.c.l.b16 %v71
    %v163 = vunpack.c.l.b16 %v72
    %v164 = vunpack.c.l.b16 %v73
    %v165 = vunpack.c.l.b16 %v74
    %v166 = vunpack.c.l.b16 %v75
    %v167 = vpack.c.b16 %v144, %v143
    %v168 = vpack.c.b16 %v146, %v145
    %v169 = vpack.c.b16 %v148, %v147
    %v170 = vpack.c.b16 %v150, %v149
    %v171 = vpack.c.b16 %v152, %v151
    %v172 = vpack.c.b16 %v154, %v153
    %v173 = vpack.c.b16 %v156, %v155
    %v174 = vpack.c.b16 %v158, %v157
    %v175 = vpack.c.b16 %v160, %v159
    %v176 = vpack.c.b16 %v162, %v161
    %v177 = vpack.c.b16 %v164, %v163
    %v178 = vpack.c.b16 %v166, %v165
    %vm191 = vcmask 523264
    %v193 = vsel %vm191, %v108, 0
    %v196 = vsel %vm191, %v110, 0
    %v199 = vsel %vm191, %v112, 0
    %v202 = vsel %vm191, %v114, 0
    %204 = vmatprep.subr.bf16.mxu0 0
    %205 = vmatpush1.bf16.msra.mxu0 %v174
    %206 = vmatprep.subr.bf16.mxu0 0
    %207 = vmatpush1.bf16.msra.mxu0 %v173
    %208 = vmatprep.subr.bf16.mxu0 0
    %209 = vmatpush1.bf16.msra.mxu0 %v172
    %210 = vmatprep.subr.bf16.mxu0 0
    %211 = vmatpush1.bf16.msra.mxu0 %v171
    %212 = vmatprep.subr.bf16.mxu0 0
    %213 = vmatpush1.bf16.msra.mxu0 %v170
    %214 = vmatprep.subr.bf16.mxu0 0
    %215 = vmatpush1.bf16.msra.mxu0 %v169
    %216 = vmatprep.subr.bf16.mxu0 0
    %217 = vmatpush1.bf16.msra.mxu0 %v168
    %218 = vmatprep.subr.bf16.mxu0 0
    %219 = vmatpush1.bf16.msra.mxu0 %v167
    %220 = vmatprep.subr.bf16.mxu0 0
    %221 = vmatpush2.bf16.msra.mxu0 0
    %222 = vmatprep.subr.bf16.mxu0 0
    %223 = vmatpush2.bf16.msra.mxu0 0
    %224 = vmatprep.subr.bf16.mxu0 0
    %225 = vmatpush2.bf16.msra.mxu0 0
    %226 = vmatprep.subr.bf16.mxu0 0
    %227 = vmatpush2.bf16.msra.mxu0 0
    %228 = vmatprep.subr.bf16.mxu0 0
    %229 = vmatpush2.bf16.msra.mxu0 %v178
    %230 = vmatprep.subr.bf16.mxu0 0
    %231 = vmatpush2.bf16.msra.mxu0 %v177
    %232 = vmatprep.subr.bf16.mxu0 0
    %233 = vmatpush2.bf16.msra.mxu0 %v176
    %234 = vmatprep.subr.bf16.mxu0 0
    %235 = vmatpush2.bf16.msra.mxu0 %v175
    %236 = vmatprep.mubr.bf16.mxu0 %v193
    %237 = vmatmul.mubr.bf16.gmra.mxu0 %v107
    %v238 = vpop.f32.mrf.mxu0
    %v239 = vadd.f32 %v81, %v238
    %v240 = vpop.f32.mrf.mxu0
    %v241 = vpop.f32.mrf.mxu0
    %v242 = vadd.f32 %v81, %v241
    %v243 = vpop.f32.mrf.mxu0
    %244 = vmatprep.mubr.bf16.mxu0 %v196
    %245 = vmatmul.mubr.bf16.gmra.mxu0 %v109
    %v246 = vpop.f32.mrf.mxu0
    %v247 = vadd.f32 %v81, %v246
    %v248 = vpop.f32.mrf.mxu0
    %v249 = vpop.f32.mrf.mxu0
    %v250 = vadd.f32 %v81, %v249
    %v251 = vpop.f32.mrf.mxu0
    %252 = vmatprep.mubr.bf16.mxu0 %v199
    %253 = vmatmul.mubr.bf16.gmra.mxu0 %v111
    %v254 = vpop.f32.mrf.mxu0
    %v255 = vadd.f32 %v81, %v254
    %v256 = vpop.f32.mrf.mxu0
    %v257 = vpop.f32.mrf.mxu0
    %v258 = vadd.f32 %v81, %v257
    %v259 = vpop.f32.mrf.mxu0
    %260 = vmatprep.mubr.bf16.mxu0 %v202
    %261 = vmatmul.mubr.bf16.gmra.mxu0 %v113
    %v262 = vpop.f32.mrf.mxu0
    %v263 = vadd.f32 %v81, %v262
    %v264 = vpop.f32.mrf.mxu0
    %v265 = vpop.f32.mrf.mxu0
    %v266 = vadd.f32 %v81, %v265
    %v267 = vpop.f32.mrf.mxu0
    %268 = vdwg.mxu0
    %v269 = vpack.c.bf16 %v242, %v239
    %v270 = vpack.c.bf16 %v250, %v247
    %v271 = vpack.c.bf16 %v258, %v255
    %v272 = vpack.c.bf16 %v266, %v263
    %v277 = vunpack.c.l.b16 %v269
    %v278 = vunpack.c.h.b16 %v269
    %v279 = vunpack.c.l.b16 %v270
    %v280 = vunpack.c.h.b16 %v270
    %v281 = vunpack.c.l.b16 %v271
    %v282 = vunpack.c.h.b16 %v271
    %v283 = vunpack.c.l.b16 %v272
    %v284 = vunpack.c.h.b16 %v272
    %v285 = vpack.c.b16 %v277, %v277
    %v286 = vpack.c.b16 %v278, %v278
    %v287 = vpack.c.b16 %v279, %v279
    %v288 = vpack.c.b16 %v280, %v280
    %v289 = vpack.c.b16 %v281, %v281
    %v290 = vpack.c.b16 %v282, %v282
    %v291 = vpack.c.b16 %v283, %v283
    %v292 = vpack.c.b16 %v284, %v284
    %301 = vst [vmem:[#allocation7] sm:$0xf] %v285
    %302 = vst [vmem:[#allocation7 + $0x4] sm:$0xf] %v286
    %303 = vst [vmem:[#allocation7 + $0x8] sm:$0xf] %v287
    %304 = vst [vmem:[#allocation7 + $0xc] sm:$0xf] %v288
    %305 = vst [vmem:[#allocation7 + $0x10] sm:$0xf] %v289
    %306 = vst [vmem:[#allocation7 + $0x14] sm:$0xf] %v290
    %307 = vst [vmem:[#allocation7 + $0x18] sm:$0xf] %v291
    %308 = vst [vmem:[#allocation7 + $0x1c] sm:$0xf] %v292
    // Predicated region
    $region22: #{tpu_custom_call.1} parent=1 // pred_check
      _
    $region23: #{tpu_custom_call.1} parent=1 // pred_check_branch
      %310 = sbr.rel (0) target = $region25
    $region24: #{tpu_custom_call.1} parent=1 // pred_region
      %s312 = ssub.s32 512, 512
      %313 = vsyncadd [#allocation4], %s312
      %s314 = sshll.u32 [#allocation7], 4
      %s315 = int_to_ptr.vmem [resolvable:$true] %s314
      %320 = dma.vmem_to_hbm [thread:$0]  %s315, 512, %s3, [#allocation4], 64, 64, 4
    $region25: #{tpu_custom_call.1} parent=1 // pred_fallthru
      _
    // Predicated region
    $region26: #{tpu_custom_call.1} parent=1 // pred_check
      _
    $region27: #{tpu_custom_call.1} parent=1 // pred_check_branch
      %322 = sbr.rel (0) target = $region29
    $region28: #{tpu_custom_call.1} parent=1 // pred_region
      %323 = dma.done [#allocation4], 512
    $region29: #{tpu_custom_call.1} parent=1 // pred_fallthru
      _
    %324 = vsyncpa [#allocation3], 1
    %325 = vsyncpa [#allocation6], 1
    %326 = vsyncpa [#allocation4], 1

</llo_original>
